<compile_context>
chip_gen: v7x
topology: tpu7x:2x2x1
jax: 0.10.0
libtpu: 0.0.40
codegen_flags: <defaults>
</compile_context>

<pallas_src>
import jax
import jax.numpy as jnp
from jax.experimental import pallas as pl
from jax.experimental.pallas import tpu as pltpu

STATE_SIZE = 8     # LunarLander-v3 observation size
ACTION_SIZE = 4    # LunarLander-v3 action count
HIDDEN = 64
LANE = 128         # TPU lane width; hidden/output dims are padded to this

# Packed parameter slab layout (rows x 128 lanes, bf16):
#   rows   0:8    -> W1  (8, 64) in cols [0:64]
#   row    8      -> b1 in cols [0:64], col 64 = 1.0 (constant-1 carrier lane)
#   rows  16:144  -> W2  (64, 64) in [0:64, 0:64];
#                    row 80 (= W2 row 64): b2 in cols [0:64], col 65 = 1.0
#   rows 144:272  -> W3  (64, 4)  in [0:64, 0:4];
#                    row 209 (= W3 row 65): b3 in cols [0:4]
W1_OFF = 0
BIAS_OFF = 8
W2_OFF = 16
W3_OFF = W2_OFF + LANE          # 144  (multiple of 16 -> bf16-tile aligned)
P_ROWS = W3_OFF + LANE          # 272


def _round_up(x, m):
    return (x + m - 1) // m * m


def _choose_tm(batch):
    """Batch-tile rows (multiple of 16 for bf16 sublane packing)."""
    bp16 = _round_up(batch, 16)
    if bp16 <= 512:
        return bp16                       # one grid step; per-step overhead dominates
    # >= 2 parallel steps (v7x: 2 TensorCores), tiles capped near 1024 rows,
    # sized to minimize padded rows.
    n_tiles = max(2, -(-bp16 // 1024))
    return _round_up(-(-bp16 // n_tiles), 16)


def dqn_mlp_kernel(x_ref, p_ref, o_ref):
    """One batch tile of the full MLP. x:(TM,8) bf16, p:(272,128) bf16, o:(TM,128) f32."""
    x = x_ref[...]                                        # (TM, 8)  bf16

    # Static slices of the resident packed parameter slab.
    w1 = p_ref[W1_OFF:W1_OFF + STATE_SIZE, :]             # (8,   128) bf16
    b1 = p_ref[BIAS_OFF:BIAS_OFF + 1, :]                  # (1,   128) bf16: [b1 | 1 | 0..]
    w2 = p_ref[W2_OFF:W2_OFF + LANE, :]                   # (128, 128) bf16 (b2 folded in)
    w3 = p_ref[W3_OFF:W3_OFF + LANE, :]                   # (128, 128) bf16 (b3 folded in)

    # fc1 + bias + ReLU.  Lane 64 of h1 becomes exactly 1.0 (carrier lane).
    h1 = jnp.dot(x, w1, preferred_element_type=jnp.float32)
    h1 = jnp.maximum(h1 + b1.astype(jnp.float32), 0.0).astype(jnp.bfloat16)
    # fc2 (+ b2 via carrier lane) + ReLU.  Lane 65 of h2 becomes exactly 1.0.
    h2 = jnp.maximum(jnp.dot(h1, w2, preferred_element_type=jnp.float32),
                     0.0).astype(jnp.bfloat16)
    # fc3 (+ b3 via carrier lane).  Cols 4:128 stay 0 and are sliced away in jit.
    o_ref[...] = jnp.dot(h2, w3, preferred_element_type=jnp.float32)


def pack_params(params):
    """Pack the six per-layer tensors into one lane-dense (272,128) bf16 slab.

    Called once per parameter update (NOT per forward call).
    """
    w1, b1, w2, b2, w3, b3 = params
    p = jnp.zeros((P_ROWS, LANE), jnp.float32)
    p = p.at[W1_OFF:W1_OFF + STATE_SIZE, 0:HIDDEN].set(w1)
    # fc1 bias row; lane HIDDEN carries a constant 1 for fc2-bias folding.
    p = p.at[BIAS_OFF, 0:HIDDEN].set(b1.reshape(-1))
    p = p.at[BIAS_OFF, HIDDEN].set(1.0)
    # fc2 weights; row HIDDEN carries b2, and [HIDDEN, HIDDEN+1]=1 keeps the
    # constant-1 lane alive through the second ReLU for fc3-bias folding.
    p = p.at[W2_OFF:W2_OFF + HIDDEN, 0:HIDDEN].set(w2)
    p = p.at[W2_OFF + HIDDEN, 0:HIDDEN].set(b2.reshape(-1))
    p = p.at[W2_OFF + HIDDEN, HIDDEN + 1].set(1.0)
    # fc3 weights; row HIDDEN+1 carries b3.
    p = p.at[W3_OFF:W3_OFF + HIDDEN, 0:ACTION_SIZE].set(w3)
    p = p.at[W3_OFF + HIDDEN + 1, 0:ACTION_SIZE].set(b3.reshape(-1))
    return p.astype(jnp.bfloat16)


@jax.jit
def dqn_forward(state, packed):
    """state: (B, 8) f32, packed: (272,128) bf16 -> (B, 4) f32 Q-values."""
    B = state.shape[0]
    tm = _choose_tm(B)
    bp = _round_up(B, tm)
    grid = (bp // tm,)

    x = state.astype(jnp.bfloat16)
    if bp != B:
        x = jnp.pad(x, ((0, bp - B), (0, 0)))

    flops = 2 * bp * (STATE_SIZE * LANE + LANE * LANE + LANE * LANE)
    bytes_accessed = 2 * bp * STATE_SIZE + 2 * P_ROWS * LANE + 4 * bp * LANE

    out_padded = pl.pallas_call(
        dqn_mlp_kernel,
        out_shape=jax.ShapeDtypeStruct((bp, LANE), jnp.float32),
        grid=grid,
        in_specs=[
            # Activations: tiled over the (parallel) batch grid.
            pl.BlockSpec((tm, STATE_SIZE), lambda i: (i, 0)),
            # Packed params: constant block index -> DMA'd once, stays resident.
            pl.BlockSpec((P_ROWS, LANE), lambda i: (0, 0)),
        ],
        # Lane-dense f32 output slab (unmasked stores); Q-values sliced below.
        out_specs=pl.BlockSpec((tm, LANE), lambda i: (i, 0)),
        compiler_params=pltpu.CompilerParams(
            dimension_semantics=("parallel",)),
        cost_estimate=pl.CostEstimate(
            flops=flops, transcendentals=0, bytes_accessed=bytes_accessed),
    )(x, packed)

    # Fused inside the same jit -> no extra HBM round trip for the slice.
    return out_padded[:B, :ACTION_SIZE]


def init_params(key):
    """Deterministic init mimicking nn.Linear's U(-1/sqrt(fan_in), 1/sqrt(fan_in))."""
    ks = jax.random.split(key, 6)

    def linear(kw, kb, fan_in, fan_out):
        bound = 1.0 / jnp.sqrt(jnp.float32(fan_in))
        # stored (in, out): transpose of PyTorch's (out, in) layout
        w = jax.random.uniform(kw, (fan_in, fan_out), jnp.float32, -bound, bound)
        b = jax.random.uniform(kb, (fan_out,), jnp.float32, -bound, bound)
        return w, b

    w1, b1 = linear(ks[0], ks[1], STATE_SIZE, HIDDEN)
    w2, b2 = linear(ks[2], ks[3], HIDDEN, HIDDEN)
    w3, b3 = linear(ks[4], ks[5], HIDDEN, ACTION_SIZE)
    return (w1, b1, w2, b2, w3, b3)


def reference_forward(state, params):
    """Pure f32 JAX reference (module semantics)."""
    w1, b1, w2, b2, w3, b3 = params
    h1 = jnp.maximum(state @ w1 + b1, 0.0)
    h2 = jnp.maximum(h1 @ w2 + b2, 0.0)
    return h2 @ w3 + b3


def reference_forward_bf16(state, params):
    """Reference mirroring the kernel's bf16-operand / f32-accumulate path."""
    bf, f32 = jnp.bfloat16, jnp.float32
    w1, b1, w2, b2, w3, b3 = params
    x = state.astype(bf)
    h1 = jnp.dot(x, w1.astype(bf), preferred_element_type=f32)
    h1 = jnp.maximum(h1 + b1.astype(bf).astype(f32), 0.0).astype(bf)
    h2 = jnp.dot(h1, w2.astype(bf), preferred_element_type=f32)
    h2 = jnp.maximum(h2 + b2.astype(bf).astype(f32), 0.0).astype(bf)
    return jnp.dot(h2, w3.astype(bf), preferred_element_type=f32) \
        + b3.astype(bf).astype(f32)


if __name__ == "__main__":
    key = jax.random.PRNGKey(0)
    k_params, k_small, k_big = jax.random.split(key, 3)

    params = init_params(k_params)
    packed = jax.block_until_ready(pack_params(params))   # pack ONCE per weight update

    # Small inference-style batch (8 states of dimension 8).
    state_small = jax.random.normal(k_small, (8, STATE_SIZE), dtype=jnp.float32)
    q_small = jax.block_until_ready(dqn_forward(state_small, packed))
    assert q_small.shape == (8, ACTION_SIZE)
    assert jnp.allclose(q_small, reference_forward_bf16(state_small, params),
                        atol=5e-3, rtol=1e-2)
    assert jnp.allclose(q_small, reference_forward(state_small, params),
                        atol=1e-1, rtol=1e-1)

    # Replay-buffer-style batch exercising the multi-tile parallel grid + padding.
    state_big = jax.random.normal(k_big, (600, STATE_SIZE), dtype=jnp.float32)
    q_big = jax.block_until_ready(dqn_forward(state_big, packed))
    assert q_big.shape == (600, ACTION_SIZE)
    assert jnp.allclose(q_big, reference_forward_bf16(state_big, params),
                        atol=5e-3, rtol=1e-2)
    assert jnp.allclose(q_big, reference_forward(state_big, params),
                        atol=1e-1, rtol=1e-1)

    print("KERNEL_OK")
</pallas_src>

<mosaic_0001>
module attributes {stable_mosaic.version = 11 : i64} {
  func.func @dqn_mlp_kernel(%arg0: i32, %arg1: memref<16x8xbf16, #tpu.memory_space<vmem>>, %arg2: memref<272x128xbf16, #tpu.memory_space<vmem>>, %arg3: memref<16x128xf32, #tpu.memory_space<vmem>>) attributes {dimension_semantics = [#tpu.dimension_semantics<parallel>], iteration_bounds = array<i64: 1>, scalar_prefetch = 0 : i64, scratch_operands = 0 : i64, tpu.core_type = #tpu.core_type<tc>, window_params = [{transform_indices = @transform_0, window_bounds = array<i64: 16, 8>}, {pipeline_mode = #tpu.pipeline_mode<synchronous>, transform_indices = @transform_1, window_bounds = array<i64: 272, 128>}, {transform_indices = @transform_2, window_bounds = array<i64: 16, 128>}]} {
    %c0 = arith.constant 0 : index
    %c0_0 = arith.constant 0 : index
    %0 = vector.load %arg1[%c0, %c0_0] : memref<16x8xbf16, #tpu.memory_space<vmem>>, vector<16x8xbf16>
    %c0_1 = arith.constant 0 : index
    %c0_2 = arith.constant 0 : index
    %1 = vector.load %arg2[%c0_1, %c0_2] : memref<272x128xbf16, #tpu.memory_space<vmem>>, vector<8x128xbf16>
    %c8 = arith.constant 8 : index
    %c0_3 = arith.constant 0 : index
    %2 = vector.load %arg2[%c8, %c0_3] : memref<272x128xbf16, #tpu.memory_space<vmem>>, vector<1x128xbf16>
    %c16 = arith.constant 16 : index
    %c0_4 = arith.constant 0 : index
    %3 = vector.load %arg2[%c16, %c0_4] : memref<272x128xbf16, #tpu.memory_space<vmem>>, vector<128x128xbf16>
    %c144 = arith.constant 144 : index
    %c0_5 = arith.constant 0 : index
    %4 = vector.load %arg2[%c144, %c0_5] : memref<272x128xbf16, #tpu.memory_space<vmem>>, vector<128x128xbf16>
    %cst = arith.constant dense<0.000000e+00> : vector<16x128xf32>
    %5 = tpu.matmul %0, %1, %cst {dimension_numbers = #tpu.dot_dimension_numbers<[1], [0], [0], [1], [0, 0, 1, 1], [], []>} : vector<16x8xbf16>, vector<8x128xbf16>, vector<16x128xf32> -> vector<16x128xf32>
    %6 = arith.extf %2 : vector<1x128xbf16> to vector<1x128xf32>
    %7 = vector.broadcast %6 : vector<1x128xf32> to vector<16x128xf32>
    %8 = arith.addf %5, %7 : vector<16x128xf32>
    %cst_6 = arith.constant 0.000000e+00 : f32
    %9 = vector.broadcast %cst_6 : f32 to vector<16x128xf32>
    %10 = arith.maximumf %8, %9 : vector<16x128xf32>
    %11 = arith.truncf %10 : vector<16x128xf32> to vector<16x128xbf16>
    %cst_7 = arith.constant dense<0.000000e+00> : vector<16x128xf32>
    %12 = tpu.matmul %11, %3, %cst_7 {dimension_numbers = #tpu.dot_dimension_numbers<[1], [0], [0], [1], [0, 0, 1, 1], [], []>} : vector<16x128xbf16>, vector<128x128xbf16>, vector<16x128xf32> -> vector<16x128xf32>
    %cst_8 = arith.constant 0.000000e+00 : f32
    %13 = vector.broadcast %cst_8 : f32 to vector<16x128xf32>
    %14 = arith.maximumf %12, %13 : vector<16x128xf32>
    %15 = arith.truncf %14 : vector<16x128xf32> to vector<16x128xbf16>
    %cst_9 = arith.constant dense<0.000000e+00> : vector<16x128xf32>
    %16 = tpu.matmul %15, %4, %cst_9 {dimension_numbers = #tpu.dot_dimension_numbers<[1], [0], [0], [1], [0, 0, 1, 1], [], []>} : vector<16x128xbf16>, vector<128x128xbf16>, vector<16x128xf32> -> vector<16x128xf32>
    %c0_10 = arith.constant 0 : index
    %c0_11 = arith.constant 0 : index
    %17 = vector.load %arg3[%c0_10, %c0_11] : memref<16x128xf32, #tpu.memory_space<vmem>>, vector<16x128xf32>
    tpu.vector_store %arg3[%c0_10, %c0_11], %16 {strides = array<i32>} : memref<16x128xf32, #tpu.memory_space<vmem>>, vector<16x128xf32>,
    return
  }
  func.func @transform_0(%arg0: i32) -> (i32, i32) {
    %c0_i32 = arith.constant 0 : i32
    %c0_i32_0 = arith.constant 0 : i32
    return %arg0, %c0_i32 : i32, i32
  }
  func.func @transform_1(%arg0: i32) -> (i32, i32) {
    %c0_i32 = arith.constant 0 : i32
    %c0_i32_0 = arith.constant 0 : i32
    %c0_i32_1 = arith.constant 0 : i32
    return %c0_i32, %c0_i32_0 : i32, i32
  }
  func.func @transform_2(%arg0: i32) -> (i32, i32) {
    %c0_i32 = arith.constant 0 : i32
    %c0_i32_0 = arith.constant 0 : i32
    return %arg0, %c0_i32 : i32, i32
  }
}

</mosaic_0001>

<llo_original>
// kernel: dqn_forward.1
$region0: #{dqn_forward.1}
  #allocation0 [shape = 'u32[]', space=smem, size = 0x4, offset = 0x4, fixed_abs, tag = 'smem constant byte address 0x4 - core index']
  #allocation1 [shape = 'u32[144,128]{1,0:T(1,128)}', space=vmem, size = 0x12000, scoped, tag = 'internal scratch']
  %s0 = inlined_call_operand.vmem [shape: bf16[16,8], index: 0, kind: input, shape index: {}]
  %s1 = inlined_call_operand.hbm [shape: bf16[272,128], index: 1, kind: input, shape index: {}]
  %s2 = inlined_call_operand.vmem [shape: f32[16,128], index: 2, kind: output, shape index: {}]
  %s3 = sld [smem:[#allocation0]]
  $region22: #{dqn_forward.1} parent=0
    _
  %s5 = ssub.s32 1, %s3
  %s6 = scalar_select 0, %s5, %s3
  $region1: #{dqn_forward.1} parent=0
    #allocation2 [shape = 'u8[69632]{0}', space=vmem, size = 0x11000, scoped, tag = 'input window, operand 1, single buffered']
    #allocation3 [shape = 's32[1]{0}', space=sflag, size = 0x4, scoped, tag = 'scoped memory for dqn_forward.1']
    %7 = vsyncpa [#allocation3], 0
    // Predicated region
    $region2: #{dqn_forward.1} parent=1 // pred_check
      _
    $region3: #{dqn_forward.1} parent=1 // pred_check_branch
      %9 = sbr.rel (0) target = $region5
    $region4: #{dqn_forward.1} parent=1 // pred_region
      _
    $region5: #{dqn_forward.1} parent=1 // pred_fallthru
      _
    // Predicated region
    $region6: #{dqn_forward.1} parent=1 // pred_check
      _
    $region7: #{dqn_forward.1} parent=1 // pred_check_branch
      %11 = sbr.rel (0) target = $region9
    $region8: #{dqn_forward.1} parent=1 // pred_region
      %s13 = ssub.s32 2176, 2176
      %14 = vsyncadd [#allocation3], %s13
      %s15 = sshll.u32 [#allocation2], 4
      %s16 = int_to_ptr.vmem [resolvable:$true] %s15
      %21 = dma.hbm_to_vmem [thread:$0]  %s1, 2176, %s16, [#allocation3], 64, 64, 4
    $region9: #{dqn_forward.1} parent=1 // pred_fallthru
      _
    // Predicated region
    $region10: #{dqn_forward.1} parent=1 // pred_check
      _
    $region11: #{dqn_forward.1} parent=1 // pred_check_branch
      %23 = sbr.rel (0) target = $region13
    $region12: #{dqn_forward.1} parent=1 // pred_region
      %24 = dma.done [#allocation3], 2176
    $region13: #{dqn_forward.1} parent=1 // pred_fallthru
      _
    %v26 = vld [vmem:[%s0] sm:$0xf]
    %v27 = vld [vmem:[%s0 + $0x4] sm:$0xf]
    %v28 = vld [vmem:[#allocation2] sm:$0xf]
    %v29 = vld [vmem:[#allocation2 + $0x4] sm:$0x1]
    %v30 = vld [vmem:[#allocation2 + $0x8] sm:$0xf]
    %v31 = vld [vmem:[#allocation2 + $0xc] sm:$0xf]
    %v32 = vld [vmem:[#allocation2 + $0x10] sm:$0xf]
    %v33 = vld [vmem:[#allocation2 + $0x14] sm:$0xf]
    %v34 = vld [vmem:[#allocation2 + $0x18] sm:$0xf]
    %v35 = vld [vmem:[#allocation2 + $0x1c] sm:$0xf]
    %v36 = vld [vmem:[#allocation2 + $0x20] sm:$0xf]
    %v37 = vld [vmem:[#allocation2 + $0x24] sm:$0xf]
    %v38 = vld [vmem:[#allocation2 + $0x28] sm:$0xf]
    %v39 = vld [vmem:[#allocation2 + $0x2c] sm:$0xf]
    %v40 = vld [vmem:[#allocation2 + $0x30] sm:$0xf]
    %v41 = vld [vmem:[#allocation2 + $0x34] sm:$0xf]
    %v42 = vld [vmem:[#allocation2 + $0x38] sm:$0xf]
    %v43 = vld [vmem:[#allocation2 + $0x3c] sm:$0xf]
    %v44 = vld [vmem:[#allocation2 + $0x40] sm:$0xf]
    %v45 = vld [vmem:[#allocation2 + $0x44] sm:$0xf]
    %v46 = vld [vmem:[#allocation2 + $0x48] sm:$0xf]
    %v47 = vld [vmem:[#allocation2 + $0x4c] sm:$0xf]
    %v48 = vld [vmem:[#allocation2 + $0x50] sm:$0xf]
    %v49 = vld [vmem:[#allocation2 + $0x54] sm:$0xf]
    %v50 = vld [vmem:[#allocation2 + $0x58] sm:$0xf]
    %v51 = vld [vmem:[#allocation2 + $0x5c] sm:$0xf]
    %v52 = vld [vmem:[#allocation2 + $0x60] sm:$0xf]
    %v53 = vld [vmem:[#allocation2 + $0x64] sm:$0xf]
    %v54 = vld [vmem:[#allocation2 + $0x68] sm:$0xf]
    %v55 = vld [vmem:[#allocation2 + $0x6c] sm:$0xf]
    %v56 = vld [vmem:[#allocation2 + $0x70] sm:$0xf]
    %v57 = vld [vmem:[#allocation2 + $0x74] sm:$0xf]
    %v58 = vld [vmem:[#allocation2 + $0x78] sm:$0xf]
    %v59 = vld [vmem:[#allocation2 + $0x7c] sm:$0xf]
    %v60 = vld [vmem:[#allocation2 + $0x80] sm:$0xf]
    %v61 = vld [vmem:[#allocation2 + $0x84] sm:$0xf]
    %v62 = vunpack.c.l.bf16 %v29
    %v63 = vlaneseq
    %v64 = vshrl.u32 %v63, 7
    %v65 = vsub.s32 0, %v64
    %v66 = vrot.slane %v62, %v65
    %v69 = vunpack.c.l.b16 %v26
    %v70 = vunpack.c.l.b16 %v27
    %v71 = vpack.c.b16 %v70, %v69
    %vm72 = vcmask 64512
    %v74 = vsel %vm72, %v71, 0
    %vm76 = vcmask 1043456
    %v78 = vsel %vm76, %v28, 0
    %80 = vmatprep.subr.bf16.mxu0 0
    %81 = vmatpush1.bf16.msra.mxu0 %v78
    %82 = vmatprep.subr.bf16.mxu0 0
    %83 = vmatpush1.bf16.msra.mxu0 0
    %84 = vmatprep.subr.bf16.mxu0 0
    %85 = vmatpush1.bf16.msra.mxu0 0
    %86 = vmatprep.subr.bf16.mxu0 0
    %87 = vmatpush1.bf16.msra.mxu0 0
    %88 = vmatprep.subr.bf16.mxu0 0
    %89 = vmatpush1.bf16.msra.mxu0 0
    %90 = vmatprep.subr.bf16.mxu0 0
    %91 = vmatpush1.bf16.msra.mxu0 0
    %92 = vmatprep.subr.bf16.mxu0 0
    %93 = vmatpush1.bf16.msra.mxu0 0
    %94 = vmatprep.subr.bf16.mxu0 0
    %95 = vmatpush1.bf16.msra.mxu0 0
    %96 = vmatprep.subr.bf16.mxu0 0
    %97 = vmatpush1.bf16.msra.mxu0 0
    %98 = vmatprep.subr.bf16.mxu0 0
    %99 = vmatpush1.bf16.msra.mxu0 0
    %100 = vmatprep.subr.bf16.mxu0 0
    %101 = vmatpush1.bf16.msra.mxu0 0
    %102 = vmatprep.subr.bf16.mxu0 0
    %103 = vmatpush1.bf16.msra.mxu0 0
    %104 = vmatprep.subr.bf16.mxu0 0
    %105 = vmatpush1.bf16.msra.mxu0 0
    %106 = vmatprep.subr.bf16.mxu0 0
    %107 = vmatpush1.bf16.msra.mxu0 0
    %108 = vmatprep.subr.bf16.mxu0 0
    %109 = vmatpush1.bf16.msra.mxu0 0
    %110 = vmatprep.subr.bf16.mxu0 0
    %111 = vmatpush1.bf16.msra.mxu0 0
    %112 = vmatprep.mubr.bf16.mxu0 0
    %113 = vmatmul.mubr.bf16.gmra.mrb[0].mxu0 %v74
    %v114 = vpop.f32.mrb[0].mxu0
    %v115 = vadd.f32 %v66, %v114
    %v116 = vpop.f32.mrb[0].mxu0
    %v117 = vpop.f32.mrb[0].mxu0
    %v118 = vadd.f32 %v66, %v117
    %v119 = vpop.f32.mrb[0].mxu0
    %120 = vdwg.mxu0
    %v121 = vmax.f32 %v115, 0.0
    %v122 = vmax.f32 %v118, 0.0
    %v123 = vpack.c.bf16 %v122, %v121
    %v140 = vunpack.c.l.b16 %v30
    %v141 = vunpack.c.l.b16 %v31
    %v142 = vunpack.c.l.b16 %v32
    %v143 = vunpack.c.l.b16 %v33
    %v144 = vunpack.c.l.b16 %v34
    %v145 = vunpack.c.l.b16 %v35
    %v146 = vunpack.c.l.b16 %v36
    %v147 = vunpack.c.l.b16 %v37
    %v148 = vunpack.c.l.b16 %v38
    %v149 = vunpack.c.l.b16 %v39
    %v150 = vunpack.c.l.b16 %v40
    %v151 = vunpack.c.l.b16 %v41
    %v152 = vunpack.c.l.b16 %v42
    %v153 = vunpack.c.l.b16 %v43
    %v154 = vunpack.c.l.b16 %v44
    %v155 = vunpack.c.l.b16 %v45
    %v156 = vpack.c.b16 %v141, %v140
    %v157 = vpack.c.b16 %v143, %v142
    %v158 = vpack.c.b16 %v145, %v144
    %v159 = vpack.c.b16 %v147, %v146
    %v160 = vpack.c.b16 %v149, %v148
    %v161 = vpack.c.b16 %v151, %v150
    %v162 = vpack.c.b16 %v153, %v152
    %v163 = vpack.c.b16 %v155, %v154
    %172 = vmatprep.subr.bf16.mxu0 0
    %173 = vmatpush1.bf16.msra.mxu0 %v156
    %174 = vmatprep.subr.bf16.mxu0 0
    %175 = vmatpush1.bf16.msra.mxu0 %v157
    %176 = vmatprep.subr.bf16.mxu0 0
    %177 = vmatpush1.bf16.msra.mxu0 %v158
    %178 = vmatprep.subr.bf16.mxu0 0
    %179 = vmatpush1.bf16.msra.mxu0 %v159
    %180 = vmatprep.subr.bf16.mxu0 0
    %181 = vmatpush1.bf16.msra.mxu0 %v160
    %182 = vmatprep.subr.bf16.mxu0 0
    %183 = vmatpush1.bf16.msra.mxu0 %v161
    %184 = vmatprep.subr.bf16.mxu0 0
    %185 = vmatpush1.bf16.msra.mxu0 %v162
    %186 = vmatprep.subr.bf16.mxu0 0
    %187 = vmatpush1.bf16.msra.mxu0 %v163
    %188 = vmatprep.subr.bf16.mxu0 0
    %189 = vmatpush1.bf16.msra.mxu0 0
    %190 = vmatprep.subr.bf16.mxu0 0
    %191 = vmatpush1.bf16.msra.mxu0 0
    %192 = vmatprep.subr.bf16.mxu0 0
    %193 = vmatpush1.bf16.msra.mxu0 0
    %194 = vmatprep.subr.bf16.mxu0 0
    %195 = vmatpush1.bf16.msra.mxu0 0
    %196 = vmatprep.subr.bf16.mxu0 0
    %197 = vmatpush1.bf16.msra.mxu0 0
    %198 = vmatprep.subr.bf16.mxu0 0
    %199 = vmatpush1.bf16.msra.mxu0 0
    %200 = vmatprep.subr.bf16.mxu0 0
    %201 = vmatpush1.bf16.msra.mxu0 0
    %202 = vmatprep.subr.bf16.mxu0 0
    %203 = vmatpush1.bf16.msra.mxu0 0
    %204 = vmatprep.mubr.bf16.mxu0 0
    %205 = vmatmul.mubr.bf16.gmra.mrb[0].mxu0 %v123
    %v206 = vpop.f32.mrb[0].mxu0
    %v207 = vadd.f32 0.0, %v206
    %v208 = vpop.f32.mrb[0].mxu0
    %v209 = vpop.f32.mrb[0].mxu0
    %v210 = vadd.f32 0.0, %v209
    %v211 = vpop.f32.mrb[0].mxu0
    %212 = vdwg.mxu0
    %v213 = vmax.f32 %v207, 0.0
    %v214 = vmax.f32 %v210, 0.0
    %v215 = vpack.c.bf16 %v214, %v213
    %v232 = vunpack.c.l.b16 %v46
    %v233 = vunpack.c.l.b16 %v47
    %v234 = vunpack.c.l.b16 %v48
    %v235 = vunpack.c.l.b16 %v49
    %v236 = vunpack.c.l.b16 %v50
    %v237 = vunpack.c.l.b16 %v51
    %v238 = vunpack.c.l.b16 %v52
    %v239 = vunpack.c.l.b16 %v53
    %v240 = vunpack.c.l.b16 %v54
    %v241 = vunpack.c.l.b16 %v55
    %v242 = vunpack.c.l.b16 %v56
    %v243 = vunpack.c.l.b16 %v57
    %v244 = vunpack.c.l.b16 %v58
    %v245 = vunpack.c.l.b16 %v59
    %v246 = vunpack.c.l.b16 %v60
    %v247 = vunpack.c.l.b16 %v61
    %v248 = vpack.c.b16 %v233, %v232
    %v249 = vpack.c.b16 %v235, %v234
    %v250 = vpack.c.b16 %v237, %v236
    %v251 = vpack.c.b16 %v239, %v238
    %v252 = vpack.c.b16 %v241, %v240
    %v253 = vpack.c.b16 %v243, %v242
    %v254 = vpack.c.b16 %v245, %v244
    %v255 = vpack.c.b16 %v247, %v246
    %264 = vmatprep.subr.bf16.mxu0 0
    %265 = vmatpush1.bf16.msra.mxu0 %v248
    %266 = vmatprep.subr.bf16.mxu0 0
    %267 = vmatpush1.bf16.msra.mxu0 %v249
    %268 = vmatprep.subr.bf16.mxu0 0
    %269 = vmatpush1.bf16.msra.mxu0 %v250
    %270 = vmatprep.subr.bf16.mxu0 0
    %271 = vmatpush1.bf16.msra.mxu0 %v251
    %272 = vmatprep.subr.bf16.mxu0 0
    %273 = vmatpush1.bf16.msra.mxu0 %v252
    %274 = vmatprep.subr.bf16.mxu0 0
    %275 = vmatpush1.bf16.msra.mxu0 %v253
    %276 = vmatprep.subr.bf16.mxu0 0
    %277 = vmatpush1.bf16.msra.mxu0 %v254
    %278 = vmatprep.subr.bf16.mxu0 0
    %279 = vmatpush1.bf16.msra.mxu0 %v255
    %280 = vmatprep.subr.bf16.mxu0 0
    %281 = vmatpush1.bf16.msra.mxu0 0
    %282 = vmatprep.subr.bf16.mxu0 0
    %283 = vmatpush1.bf16.msra.mxu0 0
    %284 = vmatprep.subr.bf16.mxu0 0
    %285 = vmatpush1.bf16.msra.mxu0 0
    %286 = vmatprep.subr.bf16.mxu0 0
    %287 = vmatpush1.bf16.msra.mxu0 0
    %288 = vmatprep.subr.bf16.mxu0 0
    %289 = vmatpush1.bf16.msra.mxu0 0
    %290 = vmatprep.subr.bf16.mxu0 0
    %291 = vmatpush1.bf16.msra.mxu0 0
    %292 = vmatprep.subr.bf16.mxu0 0
    %293 = vmatpush1.bf16.msra.mxu0 0
    %294 = vmatprep.subr.bf16.mxu0 0
    %295 = vmatpush1.bf16.msra.mxu0 0
    %296 = vmatprep.mubr.bf16.mxu0 0
    %297 = vmatmul.mubr.bf16.gmra.mrb[0].mxu0 %v215
    %v298 = vpop.f32.mrb[0].mxu0
    %v299 = vadd.f32 0.0, %v298
    %v300 = vpop.f32.mrb[0].mxu0
    %v301 = vpop.f32.mrb[0].mxu0
    %v302 = vadd.f32 0.0, %v301
    %v303 = vpop.f32.mrb[0].mxu0
    %304 = vdwg.mxu0
    %305 = vst [vmem:[%s2] sm:$0xff] %v299
    %306 = vst [vmem:[%s2 + $0x8] sm:$0xff] %v302
    // Predicated region
    $region14: #{dqn_forward.1} parent=1 // pred_check
      _
    $region15: #{dqn_forward.1} parent=1 // pred_check_branch
      %308 = sbr.rel (0) target = $region17
    $region16: #{dqn_forward.1} parent=1 // pred_region
      _
    $region17: #{dqn_forward.1} parent=1 // pred_fallthru
      _
    // Predicated region
    $region18: #{dqn_forward.1} parent=1 // pred_check
      _
    $region19: #{dqn_forward.1} parent=1 // pred_check_branch
      %310 = sbr.rel (0) target = $region21
    $region20: #{dqn_forward.1} parent=1 // pred_region
      _
    $region21: #{dqn_forward.1} parent=1 // pred_fallthru
      _
    %311 = vsyncpa [#allocation3], 1

</llo_original>
